<compile_context>
chip_gen: v7x
topology: tpu7x:2x2x1
jax: 0.10.0
libtpu: 0.0.40
codegen_flags: <defaults>
</compile_context>

<pallas_src>
import numpy as np
import jax
import jax.numpy as jnp
from jax import lax
from jax.experimental import pallas as pl
from jax.experimental.pallas import tpu as pltpu


def _build_mask2d(pooling_counts, N):
    """Mirrors SparseMaxPool.__init__ mask construction exactly:
    i, j = range(0, N - offset), range(offset, N)  (no stride on the start index)."""
    mask2d = np.zeros((N, N), dtype=bool)
    mask2d[np.arange(N), np.arange(N)] = True
    stride, offset = 1, 0
    for c in pooling_counts:
        for _ in range(c):
            offset += stride
            if offset < N:
                idx = np.arange(0, N - offset)
                mask2d[idx, idx + offset] = True
        stride *= 2
    return mask2d


def _pick_row_tile(N):
    # Rows of the 2D map handled per grid step.  The flattened output block's minor
    # dim is tI*N, which must be a multiple of 128 (or cover the full N*N).
    for ti in (8, 16, 32):
        if N % ti == 0 and (ti * N) % 128 == 0:
            return ti
    return N


def _pick_channel_tile(D, ti, N, itemsize):
    # Keep the (double-buffered) output block at a few MiB so it fits the default
    # scoped VMEM on every generation (v5e 16 MiB, v6e/v7x 32 MiB scoped default).
    budget = 4 * 1024 * 1024
    max_td = max(8, budget // max(1, ti * N * itemsize))
    for td in (512, 256, 128, 64, 32, 16, 8):
        if D % td == 0 and td <= max_td:
            return td
    return D  # full channel dim (always a legal block extent)


def _sparse_maxpool_kernel(x_ref, mask_ref, o_ref):
    # x_ref:    (1, tD, N)      input slab for this (batch, channel-tile); i-invariant
    # mask_ref: (tI, N) int32   validity rows for this row tile
    # o_ref:    (1, tD, tI*N)   lane-dense flattened (row, col) output slab
    x = x_ref[0]                                   # (tD, N)
    tD, N = x.shape
    tI = mask_ref.shape[0]
    cdtype = x.dtype
    if jnp.issubdtype(cdtype, jnp.floating):
        neg = jnp.finfo(cdtype).min
    else:
        neg = jnp.iinfo(cdtype).min

    i0 = pl.program_id(2) * tI                             # first global row of this tile
    j_idx = lax.broadcasted_iota(jnp.int32, (1, N), 1)     # column index (hoisted)

    # Static unroll over the tI rows of this tile; all temporaries stay (tD, N).
    for r in range(tI):
        i_glb = i0 + r
        # base[d, j] = x[d, j] for j >= i, else -big  (everything left of the diagonal
        # is masked off so the running max below is the interval max over [i, j]).
        m = jnp.where(j_idx >= i_glb, x, neg)              # (tD, N)

        # Running max along j via log2(N) doubling steps:
        #   after step k: m[d, j] = max(x[d, max(i, j - 2^k + 1) : j + 1])
        s = 1
        while s < N:
            if N % 128 == 0:
                # Lane rotation on the XLU (free slot here); wrap-around is masked.
                shifted = jnp.where(j_idx >= s, pltpu.roll(m, shift=s, axis=1), neg)
            else:
                # Small-N fallback (e.g. the N=16 test): shift via concatenate.
                shifted = jnp.concatenate(
                    [jnp.full((tD, s), neg, dtype=cdtype), m[:, : N - s]], axis=1)
            m = jnp.maximum(m, shifted)
            s *= 2

        valid = mask_ref[r:r + 1, :] > 0                   # (1, N)
        row = jnp.where(valid, m, 0).astype(o_ref.dtype)   # (tD, N)
        # Store into the lane-dense flattened output slab.
        o_ref[0, :, r * N:(r + 1) * N] = row


def sparse_max_pool(x, pooling_counts):
    """Forward pass of SparseMaxPool. Returns (map2d, mask2d)."""
    B, D, N = x.shape
    mask2d_np = _build_mask2d(pooling_counts, N)
    mask_i32 = jnp.asarray(mask2d_np.astype(np.int32))

    itemsize = jnp.dtype(x.dtype).itemsize
    tI = _pick_row_tile(N)
    tD = _pick_channel_tile(D, tI, N, itemsize)
    grid = (B, D // tD, N // tI)

    map2d_flat = pl.pallas_call(
        _sparse_maxpool_kernel,
        out_shape=jax.ShapeDtypeStruct((B, D, N * N), x.dtype),
        grid=grid,
        in_specs=[
            pl.BlockSpec((1, tD, N), lambda b, d, i: (b, d, 0)),   # resident across i
            pl.BlockSpec((tI, N), lambda b, d, i: (i, 0)),
        ],
        out_specs=pl.BlockSpec((1, tD, tI * N), lambda b, d, i: (b, d, i)),
        compiler_params=pltpu.CompilerParams(
            dimension_semantics=("parallel", "parallel", "parallel"),
            vmem_limit_bytes=32 * 1024 * 1024,
        ),
    )(x, mask_i32)

    map2d = map2d_flat.reshape(B, D, N, N)
    return map2d, jnp.asarray(mask2d_np)


def _reference_forward(x_np, pooling_counts, N):
    """Numpy mirror of the PyTorch SparseMaxPool.forward (iterated stride-1 max pools
    scattered onto super-diagonals), used only for the self-test."""
    B, D, _ = x_np.shape
    map2d = np.zeros((B, D, N, N), dtype=x_np.dtype)
    map2d[:, :, np.arange(N), np.arange(N)] = x_np

    kernel_sizes = [2] * pooling_counts[0]
    for g in range(1, len(pooling_counts)):
        kernel_sizes.extend([2 * g + 1] * pooling_counts[g])

    offsets = []
    stride, offset = 1, 0
    for c in pooling_counts:
        for _ in range(c):
            offset += stride
            offsets.append(offset)
        stride *= 2

    cur = x_np.copy()
    for k, off in zip(kernel_sizes, offsets):
        L = cur.shape[-1] - (k - 1)
        cur = np.stack([cur[..., t:t + k].max(axis=-1) for t in range(L)], axis=-1)
        idx = np.arange(0, N - off)
        map2d[:, :, idx, idx + off] = cur
    return map2d


if __name__ == "__main__":
    key = jax.random.PRNGKey(0)
    B, D, N = 2, 4, 16
    # offsets covered: 1..7 (kernel-2 pools), then 9, 11, 13, 15 (kernel-3 pools)
    pooling_counts = [7, 4]

    x = jax.random.normal(key, (B, D, N), dtype=jnp.float32)

    map2d, mask2d = sparse_max_pool(x, pooling_counts)
    map2d = jax.block_until_ready(map2d)

    ref = _reference_forward(np.asarray(x), pooling_counts, N)
    np.testing.assert_allclose(np.asarray(map2d), ref, rtol=0, atol=0)
    assert np.asarray(mask2d).dtype == np.bool_

    print("KERNEL_OK")
</pallas_src>

<mosaic_0001>
module attributes {stable_mosaic.version = 11 : i64} {
  func.func @_sparse_maxpool_kernel(%arg0: i32, %arg1: i32, %arg2: i32, %arg3: memref<1x4x16xf32, #tpu.memory_space<vmem>>, %arg4: memref<8x16xi32, #tpu.memory_space<vmem>>, %arg5: memref<1x4x128xf32, #tpu.memory_space<vmem>>) attributes {dimension_semantics = [#tpu.dimension_semantics<parallel>, #tpu.dimension_semantics<parallel>, #tpu.dimension_semantics<parallel>], iteration_bounds = array<i64: 2, 1, 2>, scalar_prefetch = 0 : i64, scratch_operands = 0 : i64, tpu.core_type = #tpu.core_type<tc>, window_params = [{transform_indices = @transform_0, window_bounds = array<i64: 1, 4, 16>}, {transform_indices = @transform_1, window_bounds = array<i64: 8, 16>}, {transform_indices = @transform_2, window_bounds = array<i64: 1, 4, 128>}]} {
    %c0 = arith.constant 0 : index
    %c0_0 = arith.constant 0 : index
    %c0_1 = arith.constant 0 : index
    %0 = vector.load %arg3[%c0, %c0_0, %c0_1] : memref<1x4x16xf32, #tpu.memory_space<vmem>>, vector<1x4x16xf32>
    %1 = vector.shape_cast %0 : vector<1x4x16xf32> to vector<4x16xf32>
    %c8_i32 = arith.constant 8 : i32
    %2 = arith.muli %arg2, %c8_i32 : i32
    %3 = tpu.iota {dimensions = array<i32: 1>} : vector<1x16xi32>
    %c0_i32 = arith.constant 0 : i32
    %4 = arith.addi %2, %c0_i32 : i32
    %5 = vector.broadcast %4 : i32 to vector<1x16xi32>
    %6 = arith.cmpi sge, %3, %5 : vector<1x16xi32>
    %cst = arith.constant -3.40282347E+38 : f32
    %7 = vector.shape_cast %6 : vector<1x16xi1> to vector<1x16xi1>
    %8 = vector.broadcast %7 : vector<1x16xi1> to vector<4x16xi1>
    %9 = vector.broadcast %cst : f32 to vector<4x16xf32>
    %10 = arith.select %8, %1, %9 : vector<4x16xi1>, vector<4x16xf32>
    %cst_2 = arith.constant -3.40282347E+38 : f32
    %11 = vector.broadcast %cst_2 : f32 to vector<4x1xf32>
    %12 = vector.extract_strided_slice %10 {offsets = [0, 0], sizes = [4, 15], strides = [1, 1]} : vector<4x16xf32> to vector<4x15xf32>
    %13 = tpu.concatenate %11, %12 in 1 : vector<4x1xf32>, vector<4x15xf32> -> vector<4x16xf32>
    %14 = arith.maximumf %10, %13 : vector<4x16xf32>
    %cst_3 = arith.constant -3.40282347E+38 : f32
    %15 = vector.broadcast %cst_3 : f32 to vector<4x2xf32>
    %16 = vector.extract_strided_slice %14 {offsets = [0, 0], sizes = [4, 14], strides = [1, 1]} : vector<4x16xf32> to vector<4x14xf32>
    %17 = tpu.concatenate %15, %16 in 1 : vector<4x2xf32>, vector<4x14xf32> -> vector<4x16xf32>
    %18 = arith.maximumf %14, %17 : vector<4x16xf32>
    %cst_4 = arith.constant -3.40282347E+38 : f32
    %19 = vector.broadcast %cst_4 : f32 to vector<4x4xf32>
    %20 = vector.extract_strided_slice %18 {offsets = [0, 0], sizes = [4, 12], strides = [1, 1]} : vector<4x16xf32> to vector<4x12xf32>
    %21 = tpu.concatenate %19, %20 in 1 : vector<4x4xf32>, vector<4x12xf32> -> vector<4x16xf32>
    %22 = arith.maximumf %18, %21 : vector<4x16xf32>
    %cst_5 = arith.constant -3.40282347E+38 : f32
    %23 = vector.broadcast %cst_5 : f32 to vector<4x8xf32>
    %24 = vector.extract_strided_slice %22 {offsets = [0, 0], sizes = [4, 8], strides = [1, 1]} : vector<4x16xf32> to vector<4x8xf32>
    %25 = tpu.concatenate %23, %24 in 1 : vector<4x8xf32>, vector<4x8xf32> -> vector<4x16xf32>
    %26 = arith.maximumf %22, %25 : vector<4x16xf32>
    %c0_6 = arith.constant 0 : index
    %c0_7 = arith.constant 0 : index
    %27 = vector.load %arg4[%c0_6, %c0_7] : memref<8x16xi32, #tpu.memory_space<vmem>>, vector<1x16xi32>
    %c0_i32_8 = arith.constant 0 : i32
    %28 = vector.broadcast %c0_i32_8 : i32 to vector<1x16xi32>
    %29 = arith.cmpi sgt, %27, %28 : vector<1x16xi32>
    %c0_i32_9 = arith.constant 0 : i32
    %30 = arith.sitofp %c0_i32_9 : i32 to f32
    %31 = vector.shape_cast %29 : vector<1x16xi1> to vector<1x16xi1>
    %32 = vector.broadcast %31 : vector<1x16xi1> to vector<4x16xi1>
    %33 = vector.broadcast %30 : f32 to vector<4x16xf32>
    %34 = arith.select %32, %26, %33 : vector<4x16xi1>, vector<4x16xf32>
    %c0_10 = arith.constant 0 : index
    %c0_11 = arith.constant 0 : index
    %c0_12 = arith.constant 0 : index
    %35 = vector.load %arg5[%c0_10, %c0_11, %c0_12] : memref<1x4x128xf32, #tpu.memory_space<vmem>>, vector<1x4x16xf32>
    %36 = vector.shape_cast %35 : vector<1x4x16xf32> to vector<4x16xf32>
    %37 = vector.shape_cast %34 : vector<4x16xf32> to vector<1x4x16xf32>
    tpu.vector_store %arg5[%c0_10, %c0_11, %c0_12], %37 {strides = array<i32>} : memref<1x4x128xf32, #tpu.memory_space<vmem>>, vector<1x4x16xf32>,
    %c1_i32 = arith.constant 1 : i32
    %38 = arith.addi %2, %c1_i32 : i32
    %39 = vector.broadcast %38 : i32 to vector<1x16xi32>
    %40 = arith.cmpi sge, %3, %39 : vector<1x16xi32>
    %cst_13 = arith.constant -3.40282347E+38 : f32
    %41 = vector.shape_cast %40 : vector<1x16xi1> to vector<1x16xi1>
    %42 = vector.broadcast %41 : vector<1x16xi1> to vector<4x16xi1>
    %43 = vector.broadcast %cst_13 : f32 to vector<4x16xf32>
    %44 = arith.select %42, %1, %43 : vector<4x16xi1>, vector<4x16xf32>
    %cst_14 = arith.constant -3.40282347E+38 : f32
    %45 = vector.broadcast %cst_14 : f32 to vector<4x1xf32>
    %46 = vector.extract_strided_slice %44 {offsets = [0, 0], sizes = [4, 15], strides = [1, 1]} : vector<4x16xf32> to vector<4x15xf32>
    %47 = tpu.concatenate %45, %46 in 1 : vector<4x1xf32>, vector<4x15xf32> -> vector<4x16xf32>
    %48 = arith.maximumf %44, %47 : vector<4x16xf32>
    %cst_15 = arith.constant -3.40282347E+38 : f32
    %49 = vector.broadcast %cst_15 : f32 to vector<4x2xf32>
    %50 = vector.extract_strided_slice %48 {offsets = [0, 0], sizes = [4, 14], strides = [1, 1]} : vector<4x16xf32> to vector<4x14xf32>
    %51 = tpu.concatenate %49, %50 in 1 : vector<4x2xf32>, vector<4x14xf32> -> vector<4x16xf32>
    %52 = arith.maximumf %48, %51 : vector<4x16xf32>
    %cst_16 = arith.constant -3.40282347E+38 : f32
    %53 = vector.broadcast %cst_16 : f32 to vector<4x4xf32>
    %54 = vector.extract_strided_slice %52 {offsets = [0, 0], sizes = [4, 12], strides = [1, 1]} : vector<4x16xf32> to vector<4x12xf32>
    %55 = tpu.concatenate %53, %54 in 1 : vector<4x4xf32>, vector<4x12xf32> -> vector<4x16xf32>
    %56 = arith.maximumf %52, %55 : vector<4x16xf32>
    %cst_17 = arith.constant -3.40282347E+38 : f32
    %57 = vector.broadcast %cst_17 : f32 to vector<4x8xf32>
    %58 = vector.extract_strided_slice %56 {offsets = [0, 0], sizes = [4, 8], strides = [1, 1]} : vector<4x16xf32> to vector<4x8xf32>
    %59 = tpu.concatenate %57, %58 in 1 : vector<4x8xf32>, vector<4x8xf32> -> vector<4x16xf32>
    %60 = arith.maximumf %56, %59 : vector<4x16xf32>
    %c1 = arith.constant 1 : index
    %c0_18 = arith.constant 0 : index
    %61 = vector.load %arg4[%c1, %c0_18] : memref<8x16xi32, #tpu.memory_space<vmem>>, vector<1x16xi32>
    %c0_i32_19 = arith.constant 0 : i32
    %62 = vector.broadcast %c0_i32_19 : i32 to vector<1x16xi32>
    %63 = arith.cmpi sgt, %61, %62 : vector<1x16xi32>
    %c0_i32_20 = arith.constant 0 : i32
    %64 = arith.sitofp %c0_i32_20 : i32 to f32
    %65 = vector.shape_cast %63 : vector<1x16xi1> to vector<1x16xi1>
    %66 = vector.broadcast %65 : vector<1x16xi1> to vector<4x16xi1>
    %67 = vector.broadcast %64 : f32 to vector<4x16xf32>
    %68 = arith.select %66, %60, %67 : vector<4x16xi1>, vector<4x16xf32>
    %c0_21 = arith.constant 0 : index
    %c0_22 = arith.constant 0 : index
    %c16 = arith.constant 16 : index
    %69 = vector.load %arg5[%c0_21, %c0_22, %c16] : memref<1x4x128xf32, #tpu.memory_space<vmem>>, vector<1x4x16xf32>
    %70 = vector.shape_cast %69 : vector<1x4x16xf32> to vector<4x16xf32>
    %71 = vector.shape_cast %68 : vector<4x16xf32> to vector<1x4x16xf32>
    tpu.vector_store %arg5[%c0_21, %c0_22, %c16], %71 {strides = array<i32>} : memref<1x4x128xf32, #tpu.memory_space<vmem>>, vector<1x4x16xf32>,
    %c2_i32 = arith.constant 2 : i32
    %72 = arith.addi %2, %c2_i32 : i32
    %73 = vector.broadcast %72 : i32 to vector<1x16xi32>
    %74 = arith.cmpi sge, %3, %73 : vector<1x16xi32>
    %cst_23 = arith.constant -3.40282347E+38 : f32
    %75 = vector.shape_cast %74 : vector<1x16xi1> to vector<1x16xi1>
    %76 = vector.broadcast %75 : vector<1x16xi1> to vector<4x16xi1>
    %77 = vector.broadcast %cst_23 : f32 to vector<4x16xf32>
    %78 = arith.select %76, %1, %77 : vector<4x16xi1>, vector<4x16xf32>
    %cst_24 = arith.constant -3.40282347E+38 : f32
    %79 = vector.broadcast %cst_24 : f32 to vector<4x1xf32>
    %80 = vector.extract_strided_slice %78 {offsets = [0, 0], sizes = [4, 15], strides = [1, 1]} : vector<4x16xf32> to vector<4x15xf32>
    %81 = tpu.concatenate %79, %80 in 1 : vector<4x1xf32>, vector<4x15xf32> -> vector<4x16xf32>
    %82 = arith.maximumf %78, %81 : vector<4x16xf32>
    %cst_25 = arith.constant -3.40282347E+38 : f32
    %83 = vector.broadcast %cst_25 : f32 to vector<4x2xf32>
    %84 = vector.extract_strided_slice %82 {offsets = [0, 0], sizes = [4, 14], strides = [1, 1]} : vector<4x16xf32> to vector<4x14xf32>
    %85 = tpu.concatenate %83, %84 in 1 : vector<4x2xf32>, vector<4x14xf32> -> vector<4x16xf32>
    %86 = arith.maximumf %82, %85 : vector<4x16xf32>
    %cst_26 = arith.constant -3.40282347E+38 : f32
    %87 = vector.broadcast %cst_26 : f32 to vector<4x4xf32>
    %88 = vector.extract_strided_slice %86 {offsets = [0, 0], sizes = [4, 12], strides = [1, 1]} : vector<4x16xf32> to vector<4x12xf32>
    %89 = tpu.concatenate %87, %88 in 1 : vector<4x4xf32>, vector<4x12xf32> -> vector<4x16xf32>
    %90 = arith.maximumf %86, %89 : vector<4x16xf32>
    %cst_27 = arith.constant -3.40282347E+38 : f32
    %91 = vector.broadcast %cst_27 : f32 to vector<4x8xf32>
    %92 = vector.extract_strided_slice %90 {offsets = [0, 0], sizes = [4, 8], strides = [1, 1]} : vector<4x16xf32> to vector<4x8xf32>
    %93 = tpu.concatenate %91, %92 in 1 : vector<4x8xf32>, vector<4x8xf32> -> vector<4x16xf32>
    %94 = arith.maximumf %90, %93 : vector<4x16xf32>
    %c2 = arith.constant 2 : index
    %c0_28 = arith.constant 0 : index
    %95 = vector.load %arg4[%c2, %c0_28] : memref<8x16xi32, #tpu.memory_space<vmem>>, vector<1x16xi32>
    %c0_i32_29 = arith.constant 0 : i32
    %96 = vector.broadcast %c0_i32_29 : i32 to vector<1x16xi32>
    %97 = arith.cmpi sgt, %95, %96 : vector<1x16xi32>
    %c0_i32_30 = arith.constant 0 : i32
    %98 = arith.sitofp %c0_i32_30 : i32 to f32
    %99 = vector.shape_cast %97 : vector<1x16xi1> to vector<1x16xi1>
    %100 = vector.broadcast %99 : vector<1x16xi1> to vector<4x16xi1>
    %101 = vector.broadcast %98 : f32 to vector<4x16xf32>
    %102 = arith.select %100, %94, %101 : vector<4x16xi1>, vector<4x16xf32>
    %c0_31 = arith.constant 0 : index
    %c0_32 = arith.constant 0 : index
    %c32 = arith.constant 32 : index
    %103 = vector.load %arg5[%c0_31, %c0_32, %c32] : memref<1x4x128xf32, #tpu.memory_space<vmem>>, vector<1x4x16xf32>
    %104 = vector.shape_cast %103 : vector<1x4x16xf32> to vector<4x16xf32>
    %105 = vector.shape_cast %102 : vector<4x16xf32> to vector<1x4x16xf32>
    tpu.vector_store %arg5[%c0_31, %c0_32, %c32], %105 {strides = array<i32>} : memref<1x4x128xf32, #tpu.memory_space<vmem>>, vector<1x4x16xf32>,
    %c3_i32 = arith.constant 3 : i32
    %106 = arith.addi %2, %c3_i32 : i32
    %107 = vector.broadcast %106 : i32 to vector<1x16xi32>
    %108 = arith.cmpi sge, %3, %107 : vector<1x16xi32>
    %cst_33 = arith.constant -3.40282347E+38 : f32
    %109 = vector.shape_cast %108 : vector<1x16xi1> to vector<1x16xi1>
    %110 = vector.broadcast %109 : vector<1x16xi1> to vector<4x16xi1>
    %111 = vector.broadcast %cst_33 : f32 to vector<4x16xf32>
    %112 = arith.select %110, %1, %111 : vector<4x16xi1>, vector<4x16xf32>
    %cst_34 = arith.constant -3.40282347E+38 : f32
    %113 = vector.broadcast %cst_34 : f32 to vector<4x1xf32>
    %114 = vector.extract_strided_slice %112 {offsets = [0, 0], sizes = [4, 15], strides = [1, 1]} : vector<4x16xf32> to vector<4x15xf32>
    %115 = tpu.concatenate %113, %114 in 1 : vector<4x1xf32>, vector<4x15xf32> -> vector<4x16xf32>
    %116 = arith.maximumf %112, %115 : vector<4x16xf32>
    %cst_35 = arith.constant -3.40282347E+38 : f32
    %117 = vector.broadcast %cst_35 : f32 to vector<4x2xf32>
    %118 = vector.extract_strided_slice %116 {offsets = [0, 0], sizes = [4, 14], strides = [1, 1]} : vector<4x16xf32> to vector<4x14xf32>
    %119 = tpu.concatenate %117, %118 in 1 : vector<4x2xf32>, vector<4x14xf32> -> vector<4x16xf32>
    %120 = arith.maximumf %116, %119 : vector<4x16xf32>
    %cst_36 = arith.constant -3.40282347E+38 : f32
    %121 = vector.broadcast %cst_36 : f32 to vector<4x4xf32>
    %122 = vector.extract_strided_slice %120 {offsets = [0, 0], sizes = [4, 12], strides = [1, 1]} : vector<4x16xf32> to vector<4x12xf32>
    %123 = tpu.concatenate %121, %122 in 1 : vector<4x4xf32>, vector<4x12xf32> -> vector<4x16xf32>
    %124 = arith.maximumf %120, %123 : vector<4x16xf32>
    %cst_37 = arith.constant -3.40282347E+38 : f32
    %125 = vector.broadcast %cst_37 : f32 to vector<4x8xf32>
    %126 = vector.extract_strided_slice %124 {offsets = [0, 0], sizes = [4, 8], strides = [1, 1]} : vector<4x16xf32> to vector<4x8xf32>
    %127 = tpu.concatenate %125, %126 in 1 : vector<4x8xf32>, vector<4x8xf32> -> vector<4x16xf32>
    %128 = arith.maximumf %124, %127 : vector<4x16xf32>
    %c3 = arith.constant 3 : index
    %c0_38 = arith.constant 0 : index
    %129 = vector.load %arg4[%c3, %c0_38] : memref<8x16xi32, #tpu.memory_space<vmem>>, vector<1x16xi32>
    %c0_i32_39 = arith.constant 0 : i32
    %130 = vector.broadcast %c0_i32_39 : i32 to vector<1x16xi32>
    %131 = arith.cmpi sgt, %129, %130 : vector<1x16xi32>
    %c0_i32_40 = arith.constant 0 : i32
    %132 = arith.sitofp %c0_i32_40 : i32 to f32
    %133 = vector.shape_cast %131 : vector<1x16xi1> to vector<1x16xi1>
    %134 = vector.broadcast %133 : vector<1x16xi1> to vector<4x16xi1>
    %135 = vector.broadcast %132 : f32 to vector<4x16xf32>
    %136 = arith.select %134, %128, %135 : vector<4x16xi1>, vector<4x16xf32>
    %c0_41 = arith.constant 0 : index
    %c0_42 = arith.constant 0 : index
    %c48 = arith.constant 48 : index
    %137 = vector.load %arg5[%c0_41, %c0_42, %c48] : memref<1x4x128xf32, #tpu.memory_space<vmem>>, vector<1x4x16xf32>
    %138 = vector.shape_cast %137 : vector<1x4x16xf32> to vector<4x16xf32>
    %139 = vector.shape_cast %136 : vector<4x16xf32> to vector<1x4x16xf32>
    tpu.vector_store %arg5[%c0_41, %c0_42, %c48], %139 {strides = array<i32>} : memref<1x4x128xf32, #tpu.memory_space<vmem>>, vector<1x4x16xf32>,
    %c4_i32 = arith.constant 4 : i32
    %140 = arith.addi %2, %c4_i32 : i32
    %141 = vector.broadcast %140 : i32 to vector<1x16xi32>
    %142 = arith.cmpi sge, %3, %141 : vector<1x16xi32>
    %cst_43 = arith.constant -3.40282347E+38 : f32
    %143 = vector.shape_cast %142 : vector<1x16xi1> to vector<1x16xi1>
    %144 = vector.broadcast %143 : vector<1x16xi1> to vector<4x16xi1>
    %145 = vector.broadcast %cst_43 : f32 to vector<4x16xf32>
    %146 = arith.select %144, %1, %145 : vector<4x16xi1>, vector<4x16xf32>
    %cst_44 = arith.constant -3.40282347E+38 : f32
    %147 = vector.broadcast %cst_44 : f32 to vector<4x1xf32>
    %148 = vector.extract_strided_slice %146 {offsets = [0, 0], sizes = [4, 15], strides = [1, 1]} : vector<4x16xf32> to vector<4x15xf32>
    %149 = tpu.concatenate %147, %148 in 1 : vector<4x1xf32>, vector<4x15xf32> -> vector<4x16xf32>
    %150 = arith.maximumf %146, %149 : vector<4x16xf32>
    %cst_45 = arith.constant -3.40282347E+38 : f32
    %151 = vector.broadcast %cst_45 : f32 to vector<4x2xf32>
    %152 = vector.extract_strided_slice %150 {offsets = [0, 0], sizes = [4, 14], strides = [1, 1]} : vector<4x16xf32> to vector<4x14xf32>
    %153 = tpu.concatenate %151, %152 in 1 : vector<4x2xf32>, vector<4x14xf32> -> vector<4x16xf32>
    %154 = arith.maximumf %150, %153 : vector<4x16xf32>
    %cst_46 = arith.constant -3.40282347E+38 : f32
    %155 = vector.broadcast %cst_46 : f32 to vector<4x4xf32>
    %156 = vector.extract_strided_slice %154 {offsets = [0, 0], sizes = [4, 12], strides = [1, 1]} : vector<4x16xf32> to vector<4x12xf32>
    %157 = tpu.concatenate %155, %156 in 1 : vector<4x4xf32>, vector<4x12xf32> -> vector<4x16xf32>
    %158 = arith.maximumf %154, %157 : vector<4x16xf32>
    %cst_47 = arith.constant -3.40282347E+38 : f32
    %159 = vector.broadcast %cst_47 : f32 to vector<4x8xf32>
    %160 = vector.extract_strided_slice %158 {offsets = [0, 0], sizes = [4, 8], strides = [1, 1]} : vector<4x16xf32> to vector<4x8xf32>
    %161 = tpu.concatenate %159, %160 in 1 : vector<4x8xf32>, vector<4x8xf32> -> vector<4x16xf32>
    %162 = arith.maximumf %158, %161 : vector<4x16xf32>
    %c4 = arith.constant 4 : index
    %c0_48 = arith.constant 0 : index
    %163 = vector.load %arg4[%c4, %c0_48] : memref<8x16xi32, #tpu.memory_space<vmem>>, vector<1x16xi32>
    %c0_i32_49 = arith.constant 0 : i32
    %164 = vector.broadcast %c0_i32_49 : i32 to vector<1x16xi32>
    %165 = arith.cmpi sgt, %163, %164 : vector<1x16xi32>
    %c0_i32_50 = arith.constant 0 : i32
    %166 = arith.sitofp %c0_i32_50 : i32 to f32
    %167 = vector.shape_cast %165 : vector<1x16xi1> to vector<1x16xi1>
    %168 = vector.broadcast %167 : vector<1x16xi1> to vector<4x16xi1>
    %169 = vector.broadcast %166 : f32 to vector<4x16xf32>
    %170 = arith.select %168, %162, %169 : vector<4x16xi1>, vector<4x16xf32>
    %c0_51 = arith.constant 0 : index
    %c0_52 = arith.constant 0 : index
    %c64 = arith.constant 64 : index
    %171 = vector.load %arg5[%c0_51, %c0_52, %c64] : memref<1x4x128xf32, #tpu.memory_space<vmem>>, vector<1x4x16xf32>
    %172 = vector.shape_cast %171 : vector<1x4x16xf32> to vector<4x16xf32>
    %173 = vector.shape_cast %170 : vector<4x16xf32> to vector<1x4x16xf32>
    tpu.vector_store %arg5[%c0_51, %c0_52, %c64], %173 {strides = array<i32>} : memref<1x4x128xf32, #tpu.memory_space<vmem>>, vector<1x4x16xf32>,
    %c5_i32 = arith.constant 5 : i32
    %174 = arith.addi %2, %c5_i32 : i32
    %175 = vector.broadcast %174 : i32 to vector<1x16xi32>
    %176 = arith.cmpi sge, %3, %175 : vector<1x16xi32>
    %cst_53 = arith.constant -3.40282347E+38 : f32
    %177 = vector.shape_cast %176 : vector<1x16xi1> to vector<1x16xi1>
    %178 = vector.broadcast %177 : vector<1x16xi1> to vector<4x16xi1>
    %179 = vector.broadcast %cst_53 : f32 to vector<4x16xf32>
    %180 = arith.select %178, %1, %179 : vector<4x16xi1>, vector<4x16xf32>
    %cst_54 = arith.constant -3.40282347E+38 : f32
    %181 = vector.broadcast %cst_54 : f32 to vector<4x1xf32>
    %182 = vector.extract_strided_slice %180 {offsets = [0, 0], sizes = [4, 15], strides = [1, 1]} : vector<4x16xf32> to vector<4x15xf32>
    %183 = tpu.concatenate %181, %182 in 1 : vector<4x1xf32>, vector<4x15xf32> -> vector<4x16xf32>
    %184 = arith.maximumf %180, %183 : vector<4x16xf32>
    %cst_55 = arith.constant -3.40282347E+38 : f32
    %185 = vector.broadcast %cst_55 : f32 to vector<4x2xf32>
    %186 = vector.extract_strided_slice %184 {offsets = [0, 0], sizes = [4, 14], strides = [1, 1]} : vector<4x16xf32> to vector<4x14xf32>
    %187 = tpu.concatenate %185, %186 in 1 : vector<4x2xf32>, vector<4x14xf32> -> vector<4x16xf32>
    %188 = arith.maximumf %184, %187 : vector<4x16xf32>
    %cst_56 = arith.constant -3.40282347E+38 : f32
    %189 = vector.broadcast %cst_56 : f32 to vector<4x4xf32>
    %190 = vector.extract_strided_slice %188 {offsets = [0, 0], sizes = [4, 12], strides = [1, 1]} : vector<4x16xf32> to vector<4x12xf32>
    %191 = tpu.concatenate %189, %190 in 1 : vector<4x4xf32>, vector<4x12xf32> -> vector<4x16xf32>
    %192 = arith.maximumf %188, %191 : vector<4x16xf32>
    %cst_57 = arith.constant -3.40282347E+38 : f32
    %193 = vector.broadcast %cst_57 : f32 to vector<4x8xf32>
    %194 = vector.extract_strided_slice %192 {offsets = [0, 0], sizes = [4, 8], strides = [1, 1]} : vector<4x16xf32> to vector<4x8xf32>
    %195 = tpu.concatenate %193, %194 in 1 : vector<4x8xf32>, vector<4x8xf32> -> vector<4x16xf32>
    %196 = arith.maximumf %192, %195 : vector<4x16xf32>
    %c5 = arith.constant 5 : index
    %c0_58 = arith.constant 0 : index
    %197 = vector.load %arg4[%c5, %c0_58] : memref<8x16xi32, #tpu.memory_space<vmem>>, vector<1x16xi32>
    %c0_i32_59 = arith.constant 0 : i32
    %198 = vector.broadcast %c0_i32_59 : i32 to vector<1x16xi32>
    %199 = arith.cmpi sgt, %197, %198 : vector<1x16xi32>
    %c0_i32_60 = arith.constant 0 : i32
    %200 = arith.sitofp %c0_i32_60 : i32 to f32
    %201 = vector.shape_cast %199 : vector<1x16xi1> to vector<1x16xi1>
    %202 = vector.broadcast %201 : vector<1x16xi1> to vector<4x16xi1>
    %203 = vector.broadcast %200 : f32 to vector<4x16xf32>
    %204 = arith.select %202, %196, %203 : vector<4x16xi1>, vector<4x16xf32>
    %c0_61 = arith.constant 0 : index
    %c0_62 = arith.constant 0 : index
    %c80 = arith.constant 80 : index
    %205 = vector.load %arg5[%c0_61, %c0_62, %c80] : memref<1x4x128xf32, #tpu.memory_space<vmem>>, vector<1x4x16xf32>
    %206 = vector.shape_cast %205 : vector<1x4x16xf32> to vector<4x16xf32>
    %207 = vector.shape_cast %204 : vector<4x16xf32> to vector<1x4x16xf32>
    tpu.vector_store %arg5[%c0_61, %c0_62, %c80], %207 {strides = array<i32>} : memref<1x4x128xf32, #tpu.memory_space<vmem>>, vector<1x4x16xf32>,
    %c6_i32 = arith.constant 6 : i32
    %208 = arith.addi %2, %c6_i32 : i32
    %209 = vector.broadcast %208 : i32 to vector<1x16xi32>
    %210 = arith.cmpi sge, %3, %209 : vector<1x16xi32>
    %cst_63 = arith.constant -3.40282347E+38 : f32
    %211 = vector.shape_cast %210 : vector<1x16xi1> to vector<1x16xi1>
    %212 = vector.broadcast %211 : vector<1x16xi1> to vector<4x16xi1>
    %213 = vector.broadcast %cst_63 : f32 to vector<4x16xf32>
    %214 = arith.select %212, %1, %213 : vector<4x16xi1>, vector<4x16xf32>
    %cst_64 = arith.constant -3.40282347E+38 : f32
    %215 = vector.broadcast %cst_64 : f32 to vector<4x1xf32>
    %216 = vector.extract_strided_slice %214 {offsets = [0, 0], sizes = [4, 15], strides = [1, 1]} : vector<4x16xf32> to vector<4x15xf32>
    %217 = tpu.concatenate %215, %216 in 1 : vector<4x1xf32>, vector<4x15xf32> -> vector<4x16xf32>
    %218 = arith.maximumf %214, %217 : vector<4x16xf32>
    %cst_65 = arith.constant -3.40282347E+38 : f32
    %219 = vector.broadcast %cst_65 : f32 to vector<4x2xf32>
    %220 = vector.extract_strided_slice %218 {offsets = [0, 0], sizes = [4, 14], strides = [1, 1]} : vector<4x16xf32> to vector<4x14xf32>
    %221 = tpu.concatenate %219, %220 in 1 : vector<4x2xf32>, vector<4x14xf32> -> vector<4x16xf32>
    %222 = arith.maximumf %218, %221 : vector<4x16xf32>
    %cst_66 = arith.constant -3.40282347E+38 : f32
    %223 = vector.broadcast %cst_66 : f32 to vector<4x4xf32>
    %224 = vector.extract_strided_slice %222 {offsets = [0, 0], sizes = [4, 12], strides = [1, 1]} : vector<4x16xf32> to vector<4x12xf32>
    %225 = tpu.concatenate %223, %224 in 1 : vector<4x4xf32>, vector<4x12xf32> -> vector<4x16xf32>
    %226 = arith.maximumf %222, %225 : vector<4x16xf32>
    %cst_67 = arith.constant -3.40282347E+38 : f32
    %227 = vector.broadcast %cst_67 : f32 to vector<4x8xf32>
    %228 = vector.extract_strided_slice %226 {offsets = [0, 0], sizes = [4, 8], strides = [1, 1]} : vector<4x16xf32> to vector<4x8xf32>
    %229 = tpu.concatenate %227, %228 in 1 : vector<4x8xf32>, vector<4x8xf32> -> vector<4x16xf32>
    %230 = arith.maximumf %226, %229 : vector<4x16xf32>
    %c6 = arith.constant 6 : index
    %c0_68 = arith.constant 0 : index
    %231 = vector.load %arg4[%c6, %c0_68] : memref<8x16xi32, #tpu.memory_space<vmem>>, vector<1x16xi32>
    %c0_i32_69 = arith.constant 0 : i32
    %232 = vector.broadcast %c0_i32_69 : i32 to vector<1x16xi32>
    %233 = arith.cmpi sgt, %231, %232 : vector<1x16xi32>
    %c0_i32_70 = arith.constant 0 : i32
    %234 = arith.sitofp %c0_i32_70 : i32 to f32
    %235 = vector.shape_cast %233 : vector<1x16xi1> to vector<1x16xi1>
    %236 = vector.broadcast %235 : vector<1x16xi1> to vector<4x16xi1>
    %237 = vector.broadcast %234 : f32 to vector<4x16xf32>
    %238 = arith.select %236, %230, %237 : vector<4x16xi1>, vector<4x16xf32>
    %c0_71 = arith.constant 0 : index
    %c0_72 = arith.constant 0 : index
    %c96 = arith.constant 96 : index
    %239 = vector.load %arg5[%c0_71, %c0_72, %c96] : memref<1x4x128xf32, #tpu.memory_space<vmem>>, vector<1x4x16xf32>
    %240 = vector.shape_cast %239 : vector<1x4x16xf32> to vector<4x16xf32>
    %241 = vector.shape_cast %238 : vector<4x16xf32> to vector<1x4x16xf32>
    tpu.vector_store %arg5[%c0_71, %c0_72, %c96], %241 {strides = array<i32>} : memref<1x4x128xf32, #tpu.memory_space<vmem>>, vector<1x4x16xf32>,
    %c7_i32 = arith.constant 7 : i32
    %242 = arith.addi %2, %c7_i32 : i32
    %243 = vector.broadcast %242 : i32 to vector<1x16xi32>
    %244 = arith.cmpi sge, %3, %243 : vector<1x16xi32>
    %cst_73 = arith.constant -3.40282347E+38 : f32
    %245 = vector.shape_cast %244 : vector<1x16xi1> to vector<1x16xi1>
    %246 = vector.broadcast %245 : vector<1x16xi1> to vector<4x16xi1>
    %247 = vector.broadcast %cst_73 : f32 to vector<4x16xf32>
    %248 = arith.select %246, %1, %247 : vector<4x16xi1>, vector<4x16xf32>
    %cst_74 = arith.constant -3.40282347E+38 : f32
    %249 = vector.broadcast %cst_74 : f32 to vector<4x1xf32>
    %250 = vector.extract_strided_slice %248 {offsets = [0, 0], sizes = [4, 15], strides = [1, 1]} : vector<4x16xf32> to vector<4x15xf32>
    %251 = tpu.concatenate %249, %250 in 1 : vector<4x1xf32>, vector<4x15xf32> -> vector<4x16xf32>
    %252 = arith.maximumf %248, %251 : vector<4x16xf32>
    %cst_75 = arith.constant -3.40282347E+38 : f32
    %253 = vector.broadcast %cst_75 : f32 to vector<4x2xf32>
    %254 = vector.extract_strided_slice %252 {offsets = [0, 0], sizes = [4, 14], strides = [1, 1]} : vector<4x16xf32> to vector<4x14xf32>
    %255 = tpu.concatenate %253, %254 in 1 : vector<4x2xf32>, vector<4x14xf32> -> vector<4x16xf32>
    %256 = arith.maximumf %252, %255 : vector<4x16xf32>
    %cst_76 = arith.constant -3.40282347E+38 : f32
    %257 = vector.broadcast %cst_76 : f32 to vector<4x4xf32>
    %258 = vector.extract_strided_slice %256 {offsets = [0, 0], sizes = [4, 12], strides = [1, 1]} : vector<4x16xf32> to vector<4x12xf32>
    %259 = tpu.concatenate %257, %258 in 1 : vector<4x4xf32>, vector<4x12xf32> -> vector<4x16xf32>
    %260 = arith.maximumf %256, %259 : vector<4x16xf32>
    %cst_77 = arith.constant -3.40282347E+38 : f32
    %261 = vector.broadcast %cst_77 : f32 to vector<4x8xf32>
    %262 = vector.extract_strided_slice %260 {offsets = [0, 0], sizes = [4, 8], strides = [1, 1]} : vector<4x16xf32> to vector<4x8xf32>
    %263 = tpu.concatenate %261, %262 in 1 : vector<4x8xf32>, vector<4x8xf32> -> vector<4x16xf32>
    %264 = arith.maximumf %260, %263 : vector<4x16xf32>
    %c7 = arith.constant 7 : index
    %c0_78 = arith.constant 0 : index
    %265 = vector.load %arg4[%c7, %c0_78] : memref<8x16xi32, #tpu.memory_space<vmem>>, vector<1x16xi32>
    %c0_i32_79 = arith.constant 0 : i32
    %266 = vector.broadcast %c0_i32_79 : i32 to vector<1x16xi32>
    %267 = arith.cmpi sgt, %265, %266 : vector<1x16xi32>
    %c0_i32_80 = arith.constant 0 : i32
    %268 = arith.sitofp %c0_i32_80 : i32 to f32
    %269 = vector.shape_cast %267 : vector<1x16xi1> to vector<1x16xi1>
    %270 = vector.broadcast %269 : vector<1x16xi1> to vector<4x16xi1>
    %271 = vector.broadcast %268 : f32 to vector<4x16xf32>
    %272 = arith.select %270, %264, %271 : vector<4x16xi1>, vector<4x16xf32>
    %c0_81 = arith.constant 0 : index
    %c0_82 = arith.constant 0 : index
    %c112 = arith.constant 112 : index
    %273 = vector.load %arg5[%c0_81, %c0_82, %c112] : memref<1x4x128xf32, #tpu.memory_space<vmem>>, vector<1x4x16xf32>
    %274 = vector.shape_cast %273 : vector<1x4x16xf32> to vector<4x16xf32>
    %275 = vector.shape_cast %272 : vector<4x16xf32> to vector<1x4x16xf32>
    tpu.vector_store %arg5[%c0_81, %c0_82, %c112], %275 {strides = array<i32>} : memref<1x4x128xf32, #tpu.memory_space<vmem>>, vector<1x4x16xf32>,
    return
  }
  func.func @transform_0(%arg0: i32, %arg1: i32, %arg2: i32) -> (i32, i32, i32) {
    %c0_i32 = arith.constant 0 : i32
    %c0_i32_0 = arith.constant 0 : i32
    return %arg0, %arg1, %c0_i32 : i32, i32, i32
  }
  func.func @transform_1(%arg0: i32, %arg1: i32, %arg2: i32) -> (i32, i32) {
    %c0_i32 = arith.constant 0 : i32
    %c0_i32_0 = arith.constant 0 : i32
    return %arg2, %c0_i32 : i32, i32
  }
  func.func @transform_2(%arg0: i32, %arg1: i32, %arg2: i32) -> (i32, i32, i32) {
    %c0_i32 = arith.constant 0 : i32
    return %arg0, %arg1, %arg2 : i32, i32, i32
  }
}

</mosaic_0001>

<llo_original>
// kernel: tpu_custom_call.1
$region0: #{tpu_custom_call.1}
  #allocation0 [shape = 'u32[]', space=smem, size = 0x4, offset = 0x4, fixed_abs, tag = 'smem constant byte address 0x4 - core index']
  #allocation1 [shape = 'u32[144,128]{1,0:T(1,128)}', space=vmem, size = 0x12000, scoped, tag = 'internal scratch']
  %s0 = inlined_call_operand.hbm [shape: f32[2,4,16], index: 0, kind: input, shape index: {}]
  %s1 = inlined_call_operand.hbm [shape: s32[16,16], index: 1, kind: input, shape index: {}]
  %s2 = inlined_call_operand.hbm [shape: f32[2,4,256], index: 2, kind: output, shape index: {}]
  %s3 = sld [smem:[#allocation0]]
  $region49: #{tpu_custom_call.1} parent=0
    _
  %s5 = ssub.s32 1, %s3
  %s6 = scalar_select 0, %s5, %s3
  $region1: #{tpu_custom_call.1} parent=0
    #allocation2 [shape = 'u8[4096]{0}', space=vmem, size = 0x1000, scoped, tag = 'input window, operand 0']
    #allocation3 [shape = 's32[2]{0}', space=sflag, size = 0x8, scoped, tag = 'scoped memory for tpu_custom_call.1']
    #allocation4 [shape = 's32[2]{0}', space=sflag, size = 0x8, scoped, tag = 'scoped memory for tpu_custom_call.1']
    #allocation5 [shape = 'u8[8192]{0}', space=vmem, size = 0x2000, scoped, tag = 'input window, operand 1']
    #allocation6 [shape = 's32[2]{0}', space=sflag, size = 0x8, scoped, tag = 'scoped memory for tpu_custom_call.1']
    #allocation7 [shape = 'u8[4096]{0}', space=vmem, size = 0x1000, scoped, tag = 'output window, operand 0']
    %7 = vsyncpa [#allocation3], 0
    %s8 = scalar_lea.sflag [#allocation3], 1
    %9 = vsyncpa %s8, 0
    %10 = vsyncpa [#allocation6], 0
    %s11 = scalar_lea.sflag [#allocation6], 1
    %12 = vsyncpa %s11, 0
    %13 = vsyncpa [#allocation4], 0
    %s14 = scalar_lea.sflag [#allocation4], 1
    %15 = vsyncpa %s14, 0
    loop: start=0, step=1, limit=6
    $region2: #{tpu_custom_call.1} parent=1 // loop_pre_header
      _
    $region3: #{tpu_custom_call.1} parent=1 // loop_header
      %s17 = sphi 0, %s21
      %p18 = scmp.ge.s32.totalorder %s17, 6
      %s24 = sphi 0, %s43
      %s25 = sphi 0, %s39
      %s26 = sphi 0, %s35
      %s27 = sphi 0, %s24
      %s28 = sphi 0, %s25
      %s29 = sphi 0, %s26
      %s30 = sphi 0, %s27
      %s31 = sphi 0, %s28
      %s32 = sphi 0, %s29
      %s48 = sphi 0, %s50
      %s51 = sphi 0, %s48
      %s52 = sphi 0, %s51
      %s68 = sphi 0, %s52
      %s74 = sphi 0, %s76
      %s77 = sphi 0, %s74
      %s78 = sphi 0, %s77
      %s94 = sphi 0, %s78
      %s104 = sphi 0, %s106
      %s107 = sphi 0, %s104
      %s108 = sphi 0, %s107
      %s124 = sphi 0, %s108
    $region4: #{tpu_custom_call.1} parent=1 // loop_header_branch
      %20 = sbr.rel (%p18) target = $region8
    $region5: #{tpu_custom_call.1} parent=1 // loop_body
      %s22 = ssub.s32 %s17, 1
      %s23 = ssub.s32 %s17, 2
      %s33 = sadd.s32 1, %s26
      %p34 = scmp.ge.s32.totalorder %s33, 2
      %s35 = scalar_select %p34, 0, %s33
      %s36 = sadd.s32 1, %s25
      %s37 = scalar_select %p34, %s36, %s25
      %p38 = scmp.ge.s32.totalorder %s37, 1
      %s39 = scalar_select %p38, 0, %s37
      %s40 = sadd.s32 1, %s24
      %s41 = scalar_select %p38, %s40, %s24
      %p42 = scmp.ge.s32.totalorder %s41, 2
      %s43 = scalar_select %p42, 0, %s41
      %s44 = ssub.s32 %s24, %s43
      %s45 = ssub.s32 %s25, %s39
      %s46 = sor.u32 %s44, %s45
      %p47 = scmp.eq.s32.totalorder %s46, 0
      %s49 = sadd.s32 %s48, 1
      %s50 = scalar_select %p47, %s48, %s49
      %p53 = pneg %p47
      %p54 = scmp.eq.s32.totalorder %s17, 3
      %p55 = por %p53, %p54
      %p56 = scmp.ne.s32.totalorder %s48, %s51
      %p57 = scmp.eq.s32.totalorder %s17, 0
      %p58 = por %p56, %p57
      %p59 = scmp.ne.s32.totalorder %s48, %s51
      %p60 = scmp.eq.s32.totalorder %s22, 3
      %p61 = por %p59, %p60
      %p62 = scmp.ne.s32.totalorder %s51, %s52
      %p63 = scmp.eq.s32.totalorder %s22, 0
      %p64 = por %p62, %p63
      %p65 = scmp.ne.s32.totalorder %s51, %s52
      %p66 = scmp.eq.s32.totalorder %s23, 3
      %p67 = por %p65, %p66
      %p69 = scmp.ne.s32.totalorder %s52, %s68
      %p70 = scmp.eq.s32.totalorder %s23, 0
      %p71 = por %p69, %p70
      %s72 = ssub.s32 %s26, %s35
      %p73 = scmp.eq.s32.totalorder %s72, 0
      %s75 = sadd.s32 %s74, 1
      %s76 = scalar_select %p73, %s74, %s75
      %p79 = pneg %p73
      %p80 = scmp.eq.s32.totalorder %s17, 3
      %p81 = por %p79, %p80
      %p82 = scmp.ne.s32.totalorder %s74, %s77
      %p83 = scmp.eq.s32.totalorder %s17, 0
      %p84 = por %p82, %p83
      %p85 = scmp.ne.s32.totalorder %s74, %s77
      %p86 = scmp.eq.s32.totalorder %s22, 3
      %p87 = por %p85, %p86
      %p88 = scmp.ne.s32.totalorder %s77, %s78
      %p89 = scmp.eq.s32.totalorder %s22, 0
      %p90 = por %p88, %p89
      %p91 = scmp.ne.s32.totalorder %s77, %s78
      %p92 = scmp.eq.s32.totalorder %s23, 3
      %p93 = por %p91, %p92
      %p95 = scmp.ne.s32.totalorder %s78, %s94
      %p96 = scmp.eq.s32.totalorder %s23, 0
      %p97 = por %p95, %p96
      %s98 = ssub.s32 %s24, %s43
      %s99 = ssub.s32 %s25, %s39
      %s100 = sor.u32 %s98, %s99
      %s101 = ssub.s32 %s26, %s35
      %s102 = sor.u32 %s100, %s101
      %p103 = scmp.eq.s32.totalorder %s102, 0
      %s105 = sadd.s32 %s104, 1
      %s106 = scalar_select %p103, %s104, %s105
      %p109 = pneg %p103
      %p110 = scmp.eq.s32.totalorder %s17, 3
      %p111 = por %p109, %p110
      %p112 = scmp.ne.s32.totalorder %s104, %s107
      %p113 = scmp.eq.s32.totalorder %s17, 0
      %p114 = por %p112, %p113
      %p115 = scmp.ne.s32.totalorder %s104, %s107
      %p116 = scmp.eq.s32.totalorder %s22, 3
      %p117 = por %p115, %p116
      %p118 = scmp.ne.s32.totalorder %s107, %s108
      %p119 = scmp.eq.s32.totalorder %s22, 0
      %p120 = por %p118, %p119
      %p121 = scmp.ne.s32.totalorder %s107, %s108
      %p122 = scmp.eq.s32.totalorder %s23, 3
      %p123 = por %p121, %p122
      %p125 = scmp.ne.s32.totalorder %s108, %s124
      %p126 = scmp.eq.s32.totalorder %s23, 0
      %p127 = por %p125, %p126
      %p128 = scmp.le.s32.totalorder 1, %s17
      %p129 = scmp.lt.s32.totalorder %s17, 5
      %p130 = pnand %p128, %p129
      %p131 = pneg %p130
      // Predicated region
      $region9: #{tpu_custom_call.1} parent=5 // pred_check
        _
      $region10: #{tpu_custom_call.1} parent=5 // pred_check_branch
        %133 = sbr.rel (%p130) target = $region12
      $region11: #{tpu_custom_call.1} parent=5 // pred_region
        %s134 = ssub.s32 %s17, 1
      $region12: #{tpu_custom_call.1} parent=5 // pred_fallthru
        _
      %p135 = scmp.lt.s32.totalorder %s17, 4
      // Predicated region
      $region13: #{tpu_custom_call.1} parent=5 // pred_check
        %p136 = pneg %p135
      $region14: #{tpu_custom_call.1} parent=5 // pred_check_branch
        %138 = sbr.rel (%p136) target = $region16
      $region15: #{tpu_custom_call.1} parent=5 // pred_region
        // Predicated region
        $region17: #{tpu_custom_call.1} parent=15 // pred_check
          %p139 = pneg %p58
        $region18: #{tpu_custom_call.1} parent=15 // pred_check_branch
          %141 = sbr.rel (%p139) target = $region20
        $region19: #{tpu_custom_call.1} parent=15 // pred_region
          %s142 = sand.u32 %s48, 1
          %s143 = scalar_lea.sflag [#allocation3], %s142
          %s144 = sand.u32 %s48, 1
          %s145 = smul.addr %s144, 4
          %s146 = scalar_lea.vmem [#allocation2], %s145
          %s148 = ssub.s32 64, 64
          %149 = vsyncadd %s143, %s148
          %s150 = sadd.s32 %s25, %s24
          %s151 = smul.addr %s150, 64
          %s152 = scalar_lea.hbm %s0, %s151
          %s154 = sshll.u32 %s146, 4
          %s155 = int_to_ptr.vmem [resolvable:$true] %s154
          %157 = dma.hbm_to_vmem [thread:$0]  %s152, 64, %s155, %s143
        $region20: #{tpu_custom_call.1} parent=15 // pred_fallthru
          _
        // Predicated region
        $region21: #{tpu_custom_call.1} parent=15 // pred_check
          %p158 = pneg %p84
        $region22: #{tpu_custom_call.1} parent=15 // pred_check_branch
          %160 = sbr.rel (%p158) target = $region24
        $region23: #{tpu_custom_call.1} parent=15 // pred_region
          %s161 = sand.u32 %s74, 1
          %s162 = scalar_lea.sflag [#allocation6], %s161
          %s163 = sand.u32 %s74, 1
          %s164 = smul.addr %s163, 8
          %s165 = scalar_lea.vmem [#allocation5], %s164
          %s167 = ssub.s32 128, 128
          %168 = vsyncadd %s162, %s167
          %s169 = smul.addr %s26, 128
          %s170 = scalar_lea.hbm %s1, %s169
          %s172 = sshll.u32 %s165, 4
          %s173 = int_to_ptr.vmem [resolvable:$true] %s172
          %175 = dma.hbm_to_vmem [thread:$0]  %s170, 128, %s173, %s162
        $region24: #{tpu_custom_call.1} parent=15 // pred_fallthru
          _
      $region16: #{tpu_custom_call.1} parent=5 // pred_fallthru
        _
      %p176 = scmp.le.s32.totalorder 1, %s17
      %p177 = scmp.lt.s32.totalorder %s17, 5
      %p178 = pnand %p176, %p177
      %p179 = pneg %p178
      // Predicated region
      $region25: #{tpu_custom_call.1} parent=5 // pred_check
        _
      $region26: #{tpu_custom_call.1} parent=5 // pred_check_branch
        %181 = sbr.rel (%p178) target = $region28
      $region27: #{tpu_custom_call.1} parent=5 // pred_region
        %s182 = ssub.s32 %s17, 1
        %s183 = sand.u32 %s51, 1
        %s184 = scalar_lea.sflag [#allocation3], %s183
        %s185 = sand.u32 %s51, 1
        %s186 = smul.addr %s185, 4
        %s187 = scalar_lea.vmem [#allocation2], %s186
        // Predicated region
        $region29: #{tpu_custom_call.1} parent=27 // pred_check
          %p188 = pneg %p64
        $region30: #{tpu_custom_call.1} parent=27 // pred_check_branch
          %190 = sbr.rel (%p188) target = $region32
        $region31: #{tpu_custom_call.1} parent=27 // pred_region
          %191 = dma.done %s184, 64
        $region32: #{tpu_custom_call.1} parent=27 // pred_fallthru
          _
        %s192 = sand.u32 %s77, 1
        %s193 = scalar_lea.sflag [#allocation6], %s192
        %s194 = sand.u32 %s77, 1
        %s195 = smul.addr %s194, 8
        %s196 = scalar_lea.vmem [#allocation5], %s195
        // Predicated region
        $region33: #{tpu_custom_call.1} parent=27 // pred_check
          %p197 = pneg %p90
        $region34: #{tpu_custom_call.1} parent=27 // pred_check_branch
          %199 = sbr.rel (%p197) target = $region36
        $region35: #{tpu_custom_call.1} parent=27 // pred_region
          %200 = dma.done %s193, 128
        $region36: #{tpu_custom_call.1} parent=27 // pred_fallthru
          _
        %s201 = sand.u32 %s51, 1
        %s202 = scalar_lea.sflag [#allocation3], %s201
        %s203 = sand.u32 %s51, 1
        %s204 = smul.addr %s203, 4
        %s205 = scalar_lea.vmem [#allocation2], %s204
        %p206 = pneg %p64
        %p207 = pneg %p61
        %s208 = sand.u32 %s77, 1
        %s209 = scalar_lea.sflag [#allocation6], %s208
        %s210 = sand.u32 %s77, 1
        %s211 = smul.addr %s210, 8
        %s212 = scalar_lea.vmem [#allocation5], %s211
        %p213 = pneg %p90
        %p214 = pneg %p87
        %p215 = pneg %p120
        %p216 = pneg %p117
        %s217 = sand.u32 %s107, 1
        %s218 = scalar_lea.sflag [#allocation4], %s217
        %s219 = sand.u32 %s107, 1
        %s220 = smul.addr %s219, 4
        %s221 = scalar_lea.vmem [#allocation7], %s220
        %v222 = vld [vmem:[%s187] sm:$0xf]
        %s223 = smul.u32 %s29, 8
        %v224 = vlaneseq
        %v225 = vand.u32 %v224, 127
        %v226 = vstv %s223
        %vm227 = vcmp.ge.s32.totalorder %v225, %v226
        %v228 = vsel %vm227, 1, 0
        %vm229 = vcmp.eq.s32.totalorder %v228, 1
        %v230 = vsel %vm229, %v222, -3.4028235e+38
        %232 = vrot.lane.b32.xlu0 %v230, 1
        %v233 = vpop.permute.xlu0 %232
        %vm235 = vcmask 7168
        %v236 = vsel %vm235, -3.4028235e+38, %v233
        %v237 = vmax.f32 %v230, %v236
        %239 = vrot.lane.b32.xlu0 %v237, 2
        %v240 = vpop.permute.xlu0 %239
        %vm242 = vcmask 15360
        %v243 = vsel %vm242, -3.4028235e+38, %v240
        %v244 = vmax.f32 %v237, %v243
        %246 = vrot.lane.b32.xlu0 %v244, 4
        %v247 = vpop.permute.xlu0 %246
        %vm249 = vcmask 31744
        %v250 = vsel %vm249, -3.4028235e+38, %v247
        %v251 = vmax.f32 %v244, %v250
        %253 = vrot.lane.b32.xlu0 %v251, 8
        %v254 = vpop.permute.xlu0 %253
        %vm256 = vcmask 64512
        %v257 = vsel %vm256, -3.4028235e+38, %v254
        %v258 = vmax.f32 %v251, %v257
        %v259 = vld [vmem:[%s196] sm:$0x1]
        %vm260 = vcmp.gt.s32.totalorder %v259, 0
        %v261 = vsel %vm260, 1, 0
        %v262 = vlaneseq
        %v263 = vshrl.u32 %v262, 7
        %v264 = vsub.s32 0, %v263
        %v265 = vrot.slane %v261, %v264
        %vm266 = vcmp.eq.s32.totalorder %v265, 1
        %v267 = vsel %vm266, %v258, 0.0
        %vm268 = vcmask 125952
        %269 = vst.msk [vmem:[%s221] sm:$0xf] %vm268, %v267
        %s270 = sadd.s32 %s223, 1
        %v271 = vstv %s270
        %vm272 = vcmp.ge.s32.totalorder %v225, %v271
        %v273 = vsel %vm272, 1, 0
        %vm274 = vcmp.eq.s32.totalorder %v273, 1
        %v275 = vsel %vm274, %v222, -3.4028235e+38
        %277 = vrot.lane.b32.xlu0 %v275, 1
        %v278 = vpop.permute.xlu0 %277
        %v280 = vsel %vm235, -3.4028235e+38, %v278
        %v281 = vmax.f32 %v275, %v280
        %283 = vrot.lane.b32.xlu0 %v281, 2
        %v284 = vpop.permute.xlu0 %283
        %v286 = vsel %vm242, -3.4028235e+38, %v284
        %v287 = vmax.f32 %v281, %v286
        %289 = vrot.lane.b32.xlu0 %v287, 4
        %v290 = vpop.permute.xlu0 %289
        %v292 = vsel %vm249, -3.4028235e+38, %v290
        %v293 = vmax.f32 %v287, %v292
        %295 = vrot.lane.b32.xlu0 %v293, 8
        %v296 = vpop.permute.xlu0 %295
        %v298 = vsel %vm256, -3.4028235e+38, %v296
        %v299 = vmax.f32 %v293, %v298
        %v300 = vld [vmem:[%s196 + $0x1] sm:$0x1]
        %vm301 = vcmp.gt.s32.totalorder %v300, 0
        %v302 = vsel %vm301, 1, 0
        %v303 = vlaneseq
        %v304 = vshrl.u32 %v303, 7
        %v305 = vsub.s32 0, %v304
        %v306 = vrot.slane %v302, %v305
        %vm307 = vcmp.eq.s32.totalorder %v306, 1
        %v308 = vsel %vm307, %v299, 0.0
        %310 = vrot.lane.b32.xlu0 %v308, 16
        %v311 = vpop.permute.xlu0 %310
        %vm313 = vcmask 257152
        %314 = vst.msk [vmem:[%s221] sm:$0xf] %vm313, %v311
        %s315 = sadd.s32 %s223, 2
        %v316 = vstv %s315
        %vm317 = vcmp.ge.s32.totalorder %v225, %v316
        %v318 = vsel %vm317, 1, 0
        %vm319 = vcmp.eq.s32.totalorder %v318, 1
        %v320 = vsel %vm319, %v222, -3.4028235e+38
        %322 = vrot.lane.b32.xlu0 %v320, 1
        %v323 = vpop.permute.xlu0 %322
        %v325 = vsel %vm235, -3.4028235e+38, %v323
        %v326 = vmax.f32 %v320, %v325
        %328 = vrot.lane.b32.xlu0 %v326, 2
        %v329 = vpop.permute.xlu0 %328
        %v331 = vsel %vm242, -3.4028235e+38, %v329
        %v332 = vmax.f32 %v326, %v331
        %334 = vrot.lane.b32.xlu0 %v332, 4
        %v335 = vpop.permute.xlu0 %334
        %v337 = vsel %vm249, -3.4028235e+38, %v335
        %v338 = vmax.f32 %v332, %v337
        %340 = vrot.lane.b32.xlu0 %v338, 8
        %v341 = vpop.permute.xlu0 %340
        %v343 = vsel %vm256, -3.4028235e+38, %v341
        %v344 = vmax.f32 %v338, %v343
        %v345 = vld [vmem:[%s196 + $0x2] sm:$0x1]
        %vm346 = vcmp.gt.s32.totalorder %v345, 0
        %v347 = vsel %vm346, 1, 0
        %v348 = vlaneseq
        %v349 = vshrl.u32 %v348, 7
        %v350 = vsub.s32 0, %v349
        %v351 = vrot.slane %v347, %v350
        %vm352 = vcmp.eq.s32.totalorder %v351, 1
        %v353 = vsel %vm352, %v344, 0.0
        %355 = vrot.lane.b32.xlu0 %v353, 32
        %v356 = vpop.permute.xlu0 %355
        %vm358 = vcmask 388352
        %359 = vst.msk [vmem:[%s221] sm:$0xf] %vm358, %v356
        %s360 = sadd.s32 %s223, 3
        %v361 = vstv %s360
        %vm362 = vcmp.ge.s32.totalorder %v225, %v361
        %v363 = vsel %vm362, 1, 0
        %vm364 = vcmp.eq.s32.totalorder %v363, 1
        %v365 = vsel %vm364, %v222, -3.4028235e+38
        %367 = vrot.lane.b32.xlu0 %v365, 1
        %v368 = vpop.permute.xlu0 %367
        %v370 = vsel %vm235, -3.4028235e+38, %v368
        %v371 = vmax.f32 %v365, %v370
        %373 = vrot.lane.b32.xlu0 %v371, 2
        %v374 = vpop.permute.xlu0 %373
        %v376 = vsel %vm242, -3.4028235e+38, %v374
        %v377 = vmax.f32 %v371, %v376
        %379 = vrot.lane.b32.xlu0 %v377, 4
        %v380 = vpop.permute.xlu0 %379
        %v382 = vsel %vm249, -3.4028235e+38, %v380
        %v383 = vmax.f32 %v377, %v382
        %385 = vrot.lane.b32.xlu0 %v383, 8
        %v386 = vpop.permute.xlu0 %385
        %v388 = vsel %vm256, -3.4028235e+38, %v386
        %v389 = vmax.f32 %v383, %v388
        %v390 = vld [vmem:[%s196 + $0x3] sm:$0x1]
        %vm391 = vcmp.gt.s32.totalorder %v390, 0
        %v392 = vsel %vm391, 1, 0
        %v393 = vlaneseq
        %v394 = vshrl.u32 %v393, 7
        %v395 = vsub.s32 0, %v394
        %v396 = vrot.slane %v392, %v395
        %vm397 = vcmp.eq.s32.totalorder %v396, 1
        %v398 = vsel %vm397, %v389, 0.0
        %400 = vrot.lane.b32.xlu0 %v398, 48
        %v401 = vpop.permute.xlu0 %400
        %vm403 = vcmask 519552
        %404 = vst.msk [vmem:[%s221] sm:$0xf] %vm403, %v401
        %s405 = sadd.s32 %s223, 4
        %v406 = vstv %s405
        %vm407 = vcmp.ge.s32.totalorder %v225, %v406
        %v408 = vsel %vm407, 1, 0
        %vm409 = vcmp.eq.s32.totalorder %v408, 1
        %v410 = vsel %vm409, %v222, -3.4028235e+38
        %412 = vrot.lane.b32.xlu0 %v410, 1
        %v413 = vpop.permute.xlu0 %412
        %v415 = vsel %vm235, -3.4028235e+38, %v413
        %v416 = vmax.f32 %v410, %v415
        %418 = vrot.lane.b32.xlu0 %v416, 2
        %v419 = vpop.permute.xlu0 %418
        %v421 = vsel %vm242, -3.4028235e+38, %v419
        %v422 = vmax.f32 %v416, %v421
        %424 = vrot.lane.b32.xlu0 %v422, 4
        %v425 = vpop.permute.xlu0 %424
        %v427 = vsel %vm249, -3.4028235e+38, %v425
        %v428 = vmax.f32 %v422, %v427
        %430 = vrot.lane.b32.xlu0 %v428, 8
        %v431 = vpop.permute.xlu0 %430
        %v433 = vsel %vm256, -3.4028235e+38, %v431
        %v434 = vmax.f32 %v428, %v433
        %v435 = vld [vmem:[%s196 + $0x4] sm:$0x1]
        %vm436 = vcmp.gt.s32.totalorder %v435, 0
        %v437 = vsel %vm436, 1, 0
        %v438 = vlaneseq
        %v439 = vshrl.u32 %v438, 7
        %v440 = vsub.s32 0, %v439
        %v441 = vrot.slane %v437, %v440
        %vm442 = vcmp.eq.s32.totalorder %v441, 1
        %v443 = vsel %vm442, %v434, 0.0
        %445 = vrot.lane.b32.xlu0 %v443, 64
        %v446 = vpop.permute.xlu0 %445
        %vm448 = vcmask 650752
        %449 = vst.msk [vmem:[%s221] sm:$0xf] %vm448, %v446
        %s450 = sadd.s32 %s223, 5
        %v451 = vstv %s450
        %vm452 = vcmp.ge.s32.totalorder %v225, %v451
        %v453 = vsel %vm452, 1, 0
        %vm454 = vcmp.eq.s32.totalorder %v453, 1
        %v455 = vsel %vm454, %v222, -3.4028235e+38
        %457 = vrot.lane.b32.xlu0 %v455, 1
        %v458 = vpop.permute.xlu0 %457
        %v460 = vsel %vm235, -3.4028235e+38, %v458
        %v461 = vmax.f32 %v455, %v460
        %463 = vrot.lane.b32.xlu0 %v461, 2
        %v464 = vpop.permute.xlu0 %463
        %v466 = vsel %vm242, -3.4028235e+38, %v464
        %v467 = vmax.f32 %v461, %v466
        %469 = vrot.lane.b32.xlu0 %v467, 4
        %v470 = vpop.permute.xlu0 %469
        %v472 = vsel %vm249, -3.4028235e+38, %v470
        %v473 = vmax.f32 %v467, %v472
        %475 = vrot.lane.b32.xlu0 %v473, 8
        %v476 = vpop.permute.xlu0 %475
        %v478 = vsel %vm256, -3.4028235e+38, %v476
        %v479 = vmax.f32 %v473, %v478
        %v480 = vld [vmem:[%s196 + $0x5] sm:$0x1]
        %vm481 = vcmp.gt.s32.totalorder %v480, 0
        %v482 = vsel %vm481, 1, 0
        %v483 = vlaneseq
        %v484 = vshrl.u32 %v483, 7
        %v485 = vsub.s32 0, %v484
        %v486 = vrot.slane %v482, %v485
        %vm487 = vcmp.eq.s32.totalorder %v486, 1
        %v488 = vsel %vm487, %v479, 0.0
        %490 = vrot.lane.b32.xlu0 %v488, 80
        %v491 = vpop.permute.xlu0 %490
        %vm493 = vcmask 781952
        %494 = vst.msk [vmem:[%s221] sm:$0xf] %vm493, %v491
        %s495 = sadd.s32 %s223, 6
        %v496 = vstv %s495
        %vm497 = vcmp.ge.s32.totalorder %v225, %v496
        %v498 = vsel %vm497, 1, 0
        %vm499 = vcmp.eq.s32.totalorder %v498, 1
        %v500 = vsel %vm499, %v222, -3.4028235e+38
        %502 = vrot.lane.b32.xlu0 %v500, 1
        %v503 = vpop.permute.xlu0 %502
        %v505 = vsel %vm235, -3.4028235e+38, %v503
        %v506 = vmax.f32 %v500, %v505
        %508 = vrot.lane.b32.xlu0 %v506, 2
        %v509 = vpop.permute.xlu0 %508
        %v511 = vsel %vm242, -3.4028235e+38, %v509
        %v512 = vmax.f32 %v506, %v511
        %514 = vrot.lane.b32.xlu0 %v512, 4
        %v515 = vpop.permute.xlu0 %514
        %v517 = vsel %vm249, -3.4028235e+38, %v515
        %v518 = vmax.f32 %v512, %v517
        %520 = vrot.lane.b32.xlu0 %v518, 8
        %v521 = vpop.permute.xlu0 %520
        %v523 = vsel %vm256, -3.4028235e+38, %v521
        %v524 = vmax.f32 %v518, %v523
        %v525 = vld [vmem:[%s196 + $0x6] sm:$0x1]
        %vm526 = vcmp.gt.s32.totalorder %v525, 0
        %v527 = vsel %vm526, 1, 0
        %v528 = vlaneseq
        %v529 = vshrl.u32 %v528, 7
        %v530 = vsub.s32 0, %v529
        %v531 = vrot.slane %v527, %v530
        %vm532 = vcmp.eq.s32.totalorder %v531, 1
        %v533 = vsel %vm532, %v524, 0.0
        %535 = vrot.lane.b32.xlu0 %v533, 96
        %v536 = vpop.permute.xlu0 %535
        %vm538 = vcmask 913152
        %539 = vst.msk [vmem:[%s221] sm:$0xf] %vm538, %v536
        %s540 = sadd.s32 %s223, 7
        %v541 = vstv %s540
        %vm542 = vcmp.ge.s32.totalorder %v225, %v541
        %v543 = vsel %vm542, 1, 0
        %vm544 = vcmp.eq.s32.totalorder %v543, 1
        %v545 = vsel %vm544, %v222, -3.4028235e+38
        %547 = vrot.lane.b32.xlu0 %v545, 1
        %v548 = vpop.permute.xlu0 %547
        %v550 = vsel %vm235, -3.4028235e+38, %v548
        %v551 = vmax.f32 %v545, %v550
        %553 = vrot.lane.b32.xlu0 %v551, 2
        %v554 = vpop.permute.xlu0 %553
        %v556 = vsel %vm242, -3.4028235e+38, %v554
        %v557 = vmax.f32 %v551, %v556
        %559 = vrot.lane.b32.xlu0 %v557, 4
        %v560 = vpop.permute.xlu0 %559
        %v562 = vsel %vm249, -3.4028235e+38, %v560
        %v563 = vmax.f32 %v557, %v562
        %565 = vrot.lane.b32.xlu0 %v563, 8
        %v566 = vpop.permute.xlu0 %565
        %v568 = vsel %vm256, -3.4028235e+38, %v566
        %v569 = vmax.f32 %v563, %v568
        %v570 = vld [vmem:[%s196 + $0x7] sm:$0x1]
        %vm571 = vcmp.gt.s32.totalorder %v570, 0
        %v572 = vsel %vm571, 1, 0
        %v573 = vlaneseq
        %v574 = vshrl.u32 %v573, 7
        %v575 = vsub.s32 0, %v574
        %v576 = vrot.slane %v572, %v575
        %vm577 = vcmp.eq.s32.totalorder %v576, 1
        %v578 = vsel %vm577, %v569, 0.0
        %580 = vrot.lane.b32.xlu0 %v578, 112
        %v581 = vpop.permute.xlu0 %580
        %vm583 = vcmask 1044352
        %584 = vst.msk [vmem:[%s221] sm:$0xf] %vm583, %v581
        %s585 = sand.u32 %s107, 1
        %s586 = scalar_lea.sflag [#allocation4], %s585
        %s587 = sand.u32 %s107, 1
        %s588 = smul.addr %s587, 4
        %s589 = scalar_lea.vmem [#allocation7], %s588
        // Predicated region
        $region37: #{tpu_custom_call.1} parent=27 // pred_check
          %p590 = pneg %p117
        $region38: #{tpu_custom_call.1} parent=27 // pred_check_branch
          %592 = sbr.rel (%p590) target = $region40
        $region39: #{tpu_custom_call.1} parent=27 // pred_region
          %s594 = ssub.s32 64, 64
          %595 = vsyncadd %s586, %s594
          %s596 = smul.addr %s28, 2
          %s597 = sadd.s32 %s29, %s596
          %s598 = smul.addr %s27, 2
          %s599 = sadd.s32 %s597, %s598
          %s600 = smul.addr %s599, 64
          %s601 = scalar_lea.hbm %s2, %s600
          %s603 = sshll.u32 %s589, 4
          %s604 = int_to_ptr.vmem [resolvable:$true] %s603
          %606 = dma.vmem_to_hbm [thread:$0]  %s604, 64, %s601, %s586
        $region40: #{tpu_custom_call.1} parent=27 // pred_fallthru
          _
      $region28: #{tpu_custom_call.1} parent=5 // pred_fallthru
        _
      %p607 = scmp.le.s32.totalorder 2, %s17
      // Predicated region
      $region41: #{tpu_custom_call.1} parent=5 // pred_check
        %p608 = pneg %p607
      $region42: #{tpu_custom_call.1} parent=5 // pred_check_branch
        %610 = sbr.rel (%p608) target = $region44
      $region43: #{tpu_custom_call.1} parent=5 // pred_region
        %s611 = ssub.s32 %s17, 2
        // Predicated region
        $region45: #{tpu_custom_call.1} parent=43 // pred_check
          %p612 = pneg %p123
        $region46: #{tpu_custom_call.1} parent=43 // pred_check_branch
          %614 = sbr.rel (%p612) target = $region48
        $region47: #{tpu_custom_call.1} parent=43 // pred_region
          %s615 = sand.u32 %s108, 1
          %s616 = scalar_lea.sflag [#allocation4], %s615
          %s617 = sand.u32 %s108, 1
          %s618 = smul.addr %s617, 4
          %s619 = scalar_lea.vmem [#allocation7], %s618
          %620 = dma.done %s616, 64
        $region48: #{tpu_custom_call.1} parent=43 // pred_fallthru
          _
      $region44: #{tpu_custom_call.1} parent=5 // pred_fallthru
        _
    $region6: #{tpu_custom_call.1} parent=1 // loop_footer
      %s21 = sadd.s32 1, %s17
    $region7: #{tpu_custom_call.1} parent=1 // loop_footer_branch
      %16 = sbr.rel target = $region3
    $region8: #{tpu_custom_call.1} parent=1 // loop_exit
      _
    %621 = vsyncpa [#allocation3], 1
    %s622 = scalar_lea.sflag [#allocation3], 1
    %623 = vsyncpa %s622, 1
    %624 = vsyncpa [#allocation6], 1
    %s625 = scalar_lea.sflag [#allocation6], 1
    %626 = vsyncpa %s625, 1
    %627 = vsyncpa [#allocation4], 1
    %s628 = scalar_lea.sflag [#allocation4], 1
    %629 = vsyncpa %s628, 1

</llo_original>
